<compile_context>
chip_gen: v6e
topology: v6e:2x2x1
jax: 0.10.0
libtpu: 0.0.40
codegen_flags: <defaults>
</compile_context>

<pallas_src>
import functools

import jax
import jax.numpy as jnp
from jax.experimental import pallas as pl
from jax.experimental.pallas import tpu as pltpu


def _round_up(x, m):
    return (x + m - 1) // m * m


def _choose_block_batch(N, HW, C):
    """How many images to fuse per grid step.

    Bigger blocks amortize the ~0.35us per-step overhead and enlarge DMAs, but
    we keep >= 2 grid steps when N allows it so the 'parallel' batch axis can
    still be split across the two TensorCores on v7x.
    """
    Cp = _round_up(max(C, 1), 8)
    best = 1
    for nb in range(1, N + 1):
        if N % nb != 0:
            continue
        if N >= 2 and N // nb < 2:
            continue                                   # keep megacore balance
        patch_bytes = (9 * Cp + 8) * nb * HW * 4
        if patch_bytes > 4 * 1024 * 1024:              # cap patch VMEM growth
            continue
        best = nb
    return best


def _satlas_head_kernel(x_ref, w0_ref, w1_ref, o_ref, buf_ref, patch_ref,
                        *, C, Cp, H, W, lpad, rpad, Nb):
    """Fused conv3x3 -> ReLU -> conv3x3 for Nb batch elements.

    x_ref     : (Nb, C, H*W)        channels-first, flattened spatial
    w0_ref    : (Cp,    9*Cp+8)     col = (dy*3+dx)*Cp + ci ; col 9*Cp = bias
    w1_ref    : (Coutp, 9*Cp+8)
    o_ref     : (Nb, Coutp, H*W)    output, already NCHW layout
    buf_ref   : (Cp, lpad + H*W + rpad)   zero-extended flat image      (VMEM)
    patch_ref : (9*Cp+8, Nb*H*W)          im2col patch (+ bias ones-row)(VMEM)
    """
    HW = H * W
    NbHW = Nb * HW
    KC = 9 * Cp

    # Column (w) index of every flattened position; zero the horizontal taps
    # that would wrap across a row boundary (zero padding).
    col = jax.lax.broadcasted_iota(jnp.int32, (1, HW), 1) % W
    keep_left = col >= 1           # reading w-1 is valid
    keep_right = col <= W - 2      # reading w+1 is valid

    # --- per-step init: zero ONLY the pad strips (interior is always fully
    # overwritten).  Unconditional on purpose: scratch is per-TensorCore. ---
    buf_ref[:, :lpad] = jnp.zeros((Cp, lpad), jnp.float32)
    buf_ref[:, lpad + HW:lpad + HW + rpad] = jnp.zeros((Cp, rpad), jnp.float32)
    if Cp > C:
        # Padded-channel rows must be real zeros (uninitialized VMEM could be
        # NaN and NaN*0 would pollute the MXU accumulation).
        buf_ref[C:, lpad:lpad + HW] = jnp.zeros((Cp - C, HW), jnp.float32)
    # Bias block of the patch: one ones-row + seven zero rows (8-sublane tile).
    patch_ref[KC:KC + 8, :] = jnp.concatenate(
        [jnp.ones((1, NbHW), jnp.float32),
         jnp.zeros((7, NbHW), jnp.float32)], axis=0)

    def im2col_image(img, b):
        # img: (rows<=Cp, HW) row-major flattened image (value); writes the 9
        # taps for image b into its lane segment of the patch.
        buf_ref[:img.shape[0], lpad:lpad + HW] = img
        for dy in range(3):
            for dx in range(3):
                s = (dy - 1) * W + (dx - 1)
                # Flat shift by s: out-of-image rows read the zero pads of buf;
                # within-row wraps are zeroed by the column masks.
                tap = buf_ref[:, lpad + s:lpad + s + HW]        # (Cp, HW)
                if dx == 0:
                    tap = jnp.where(keep_left, tap, 0.0)
                elif dx == 2:
                    tap = jnp.where(keep_right, tap, 0.0)
                t = dy * 3 + dx
                # Sublane-aligned (Cp multiple of 8), lane-aligned store.
                patch_ref[t * Cp:(t + 1) * Cp, b * HW:(b + 1) * HW] = tap

    # ---- conv0 + bias + ReLU : one MXU contraction over all Nb images ----
    for b in range(Nb):
        im2col_image(x_ref[b], b)
    mid = jnp.dot(w0_ref[...], patch_ref[...],
                  preferred_element_type=jnp.float32)           # (Cp, Nb*HW)
    mid = jnp.maximum(mid, 0.0)

    # ---- conv1 + bias (intermediate never leaves VMEM) ----
    for b in range(Nb):
        im2col_image(mid[:, b * HW:(b + 1) * HW], b)
    out = jnp.dot(w1_ref[...], patch_ref[...],
                  preferred_element_type=jnp.float32)           # (Coutp, Nb*HW)

    for b in range(Nb):
        o_ref[b] = out[:, b * HW:(b + 1) * HW].astype(o_ref.dtype)


def satlas_head_forward(x_nchw, params):
    """Forward pass of SatlasHead.  Input/output are NCHW (PyTorch convention)."""
    N, Cin, H, W = x_nchw.shape
    w0, b0 = params["w0"], params["b0"]        # (3,3,Cin,Cmid), (Cmid,)
    w1, b1 = params["w1"], params["b1"]        # (3,3,Cmid,Cout), (Cout,)
    Cmid = w0.shape[-1]
    Cout = w1.shape[-1]
    assert Cmid == Cin, "SatlasHead keeps backbone_channels between the convs"
    HW = H * W

    Cp = _round_up(max(Cin, Cmid), 8)          # sublane-aligned channel count
    Coutp = _round_up(Cout, 8)
    KP = 9 * Cp + 8                            # + 8-row bias block
    lpad = _round_up(W + 1, 128)               # lane-aligned interior writes
    rpad = _round_up(W + 1, 128)
    buf_w = lpad + HW + rpad
    Nb = _choose_block_batch(N, HW, Cin)

    # Free (contiguous) reshape only: no transposes, no HBM padding copies.
    x_flat = x_nchw.reshape(N, Cin, HW)

    def pack_weights(w, b, cin, cout, rows_out):
        # Matmul form: row = out channel, column = (dy*3+dx)*Cp + ci; the last
        # 8 columns hold (bias, 0, ..., 0) matching the patch's ones-row block.
        wr = w.reshape(9, cin, cout).astype(jnp.float32)
        wr = jnp.pad(wr, ((0, 0), (0, Cp - cin), (0, 0)))        # (9, Cp, cout)
        wm = jnp.transpose(wr, (2, 0, 1)).reshape(cout, 9 * Cp)  # (cout, 9*Cp)
        bias_blk = jnp.concatenate(
            [b.reshape(cout, 1).astype(jnp.float32),
             jnp.zeros((cout, 7), jnp.float32)], axis=1)         # (cout, 8)
        full = jnp.concatenate([wm, bias_blk], axis=1)           # (cout, KP)
        return jnp.pad(full, ((0, rows_out - cout), (0, 0)))     # (rows_out, KP)

    w0_aug = pack_weights(w0, b0, Cin, Cmid, Cp)       # (Cp,    KP)
    w1_aug = pack_weights(w1, b1, Cmid, Cout, Coutp)   # (Coutp, KP)

    kernel = functools.partial(_satlas_head_kernel, C=Cin, Cp=Cp, H=H, W=W,
                               lpad=lpad, rpad=rpad, Nb=Nb)

    out_flat = pl.pallas_call(
        kernel,
        out_shape=jax.ShapeDtypeStruct((N, Coutp, HW), x_nchw.dtype),
        grid_spec=pltpu.PrefetchScalarGridSpec(
            num_scalar_prefetch=0,
            grid=(N // Nb,),
            in_specs=[
                pl.BlockSpec((Nb, Cin, HW), lambda n: (n, 0, 0)),
                pl.BlockSpec((Cp, KP), lambda n: (0, 0)),
                pl.BlockSpec((Coutp, KP), lambda n: (0, 0)),
            ],
            out_specs=pl.BlockSpec((Nb, Coutp, HW), lambda n: (n, 0, 0)),
            scratch_shapes=[
                pltpu.VMEM((Cp, buf_w), jnp.float32),
                pltpu.VMEM((KP, Nb * HW), jnp.float32),
            ],
        ),
        compiler_params=pltpu.CompilerParams(
            dimension_semantics=("parallel",)),
    )(x_flat, w0_aug, w1_aug)

    out = out_flat if Coutp == Cout else out_flat[:, :Cout, :]
    return out.reshape(N, Cout, H, W)


def init_params(key, backbone_channels, out_channels):
    k0, k1, k2, k3 = jax.random.split(key, 4)
    scale0 = 1.0 / (backbone_channels * 9) ** 0.5
    scale1 = 1.0 / (backbone_channels * 9) ** 0.5
    return {
        "w0": scale0 * jax.random.normal(
            k0, (3, 3, backbone_channels, backbone_channels), jnp.float32),
        "b0": scale0 * jax.random.normal(k1, (backbone_channels,), jnp.float32),
        "w1": scale1 * jax.random.normal(
            k2, (3, 3, backbone_channels, out_channels), jnp.float32),
        "b1": scale1 * jax.random.normal(k3, (out_channels,), jnp.float32),
    }


def _reference_forward(x_nchw, params):
    """Pure-JAX reference (lax.conv) for correctness checking."""
    def conv(x, w, b, relu):
        y = jax.lax.conv_general_dilated(
            x, w, window_strides=(1, 1), padding="SAME",
            dimension_numbers=("NCHW", "HWIO", "NCHW"),
            precision=jax.lax.Precision.HIGHEST)
        y = y + b.reshape(1, -1, 1, 1)
        return jnp.maximum(y, 0.0) if relu else y
    x = conv(x_nchw, params["w0"], params["b0"], True)
    x = conv(x, params["w1"], params["b1"], False)
    return x


if __name__ == "__main__":
    backbone_channels = 4
    out_channels = 8
    N, H, W = 2, 16, 16

    key = jax.random.PRNGKey(0)
    kx, kp = jax.random.split(key)
    x = jax.random.normal(kx, (N, backbone_channels, H, W), jnp.float32)
    params = init_params(kp, backbone_channels, out_channels)

    out = satlas_head_forward(x, params)
    out = jax.block_until_ready(out)

    ref = _reference_forward(x, params)
    assert out.shape == (N, out_channels, H, W)
    assert jnp.allclose(out, ref, rtol=1e-4, atol=1e-4), \
        float(jnp.max(jnp.abs(out - ref)))

    print("KERNEL_OK")
</pallas_src>

<mosaic_0001>
module attributes {stable_mosaic.version = 11 : i64} {
  func.func @_satlas_head_kernel(%arg0: i32, %arg1: memref<1x4x256xf32, #tpu.memory_space<vmem>>, %arg2: memref<8x80xf32, #tpu.memory_space<vmem>>, %arg3: memref<8x80xf32, #tpu.memory_space<vmem>>, %arg4: memref<1x8x256xf32, #tpu.memory_space<vmem>>, %arg5: memref<8x512xf32, #tpu.memory_space<vmem>>, %arg6: memref<80x256xf32, #tpu.memory_space<vmem>>) attributes {dimension_semantics = [#tpu.dimension_semantics<parallel>], iteration_bounds = array<i64: 2>, scalar_prefetch = 0 : i64, scratch_operands = 2 : i64, tpu.core_type = #tpu.core_type<tc>, window_params = [{transform_indices = @transform_0, window_bounds = array<i64: 1, 4, 256>}, {pipeline_mode = #tpu.pipeline_mode<synchronous>, transform_indices = @transform_1, window_bounds = array<i64: 8, 80>}, {pipeline_mode = #tpu.pipeline_mode<synchronous>, transform_indices = @transform_2, window_bounds = array<i64: 8, 80>}, {transform_indices = @transform_3, window_bounds = array<i64: 1, 8, 256>}]} {
    %0 = tpu.iota {dimensions = array<i32: 1>} : vector<1x256xi32>
    %c16_i32 = arith.constant 16 : i32
    %c0_i32 = arith.constant 0 : i32
    %1 = arith.cmpi eq, %c16_i32, %c0_i32 : i32
    %c1_i32 = arith.constant 1 : i32
    %2 = arith.select %1, %c1_i32, %c16_i32 : i32
    %3 = vector.broadcast %2 : i32 to vector<1x256xi32>
    %4 = arith.remsi %0, %3 : vector<1x256xi32>
    %c0_i32_0 = arith.constant 0 : i32
    %5 = vector.broadcast %c0_i32_0 : i32 to vector<1x256xi32>
    %6 = arith.cmpi ne, %4, %5 : vector<1x256xi32>
    %c0_i32_1 = arith.constant 0 : i32
    %7 = vector.broadcast %c0_i32_1 : i32 to vector<1x256xi32>
    %8 = arith.cmpi slt, %4, %7 : vector<1x256xi32>
    %c0_i32_2 = arith.constant 0 : i32
    %9 = arith.cmpi slt, %2, %c0_i32_2 : i32
    %10 = vector.broadcast %9 : i1 to vector<1x256xi1>
    %11 = vector.broadcast %10 : vector<1x256xi1> to vector<1x256xi1>
    %12 = arith.xori %8, %11 : vector<1x256xi1>
    %13 = arith.andi %12, %6 : vector<1x256xi1>
    %14 = vector.broadcast %2 : i32 to vector<1x256xi32>
    %15 = arith.addi %4, %14 : vector<1x256xi32>
    %16 = arith.select %13, %15, %4 : vector<1x256xi1>, vector<1x256xi32>
    %c1_i32_3 = arith.constant 1 : i32
    %17 = vector.broadcast %c1_i32_3 : i32 to vector<1x256xi32>
    %18 = arith.cmpi sge, %16, %17 : vector<1x256xi32>
    %c14_i32 = arith.constant 14 : i32
    %19 = vector.broadcast %c14_i32 : i32 to vector<1x256xi32>
    %20 = arith.cmpi sle, %16, %19 : vector<1x256xi32>
    %cst = arith.constant 0.000000e+00 : f32
    %21 = vector.broadcast %cst : f32 to vector<8x128xf32>
    %c0 = arith.constant 0 : index
    %c0_4 = arith.constant 0 : index
    %22 = vector.load %arg5[%c0, %c0_4] : memref<8x512xf32, #tpu.memory_space<vmem>>, vector<8x128xf32>
    tpu.vector_store %arg5[%c0, %c0_4], %21 {strides = array<i32>} : memref<8x512xf32, #tpu.memory_space<vmem>>, vector<8x128xf32>,
    %cst_5 = arith.constant 0.000000e+00 : f32
    %23 = vector.broadcast %cst_5 : f32 to vector<8x128xf32>
    %c0_6 = arith.constant 0 : index
    %c384 = arith.constant 384 : index
    %24 = vector.load %arg5[%c0_6, %c384] : memref<8x512xf32, #tpu.memory_space<vmem>>, vector<8x128xf32>
    tpu.vector_store %arg5[%c0_6, %c384], %23 {strides = array<i32>} : memref<8x512xf32, #tpu.memory_space<vmem>>, vector<8x128xf32>,
    %cst_7 = arith.constant 0.000000e+00 : f32
    %25 = vector.broadcast %cst_7 : f32 to vector<4x256xf32>
    %c4 = arith.constant 4 : index
    %c128 = arith.constant 128 : index
    %26 = vector.load %arg5[%c4, %c128] : memref<8x512xf32, #tpu.memory_space<vmem>>, vector<4x256xf32>
    tpu.vector_store %arg5[%c4, %c128], %25 {strides = array<i32>} : memref<8x512xf32, #tpu.memory_space<vmem>>, vector<4x256xf32>,
    %cst_8 = arith.constant 1.000000e+00 : f32
    %27 = vector.broadcast %cst_8 : f32 to vector<1x256xf32>
    %cst_9 = arith.constant 0.000000e+00 : f32
    %28 = vector.broadcast %cst_9 : f32 to vector<7x256xf32>
    %29 = tpu.concatenate %27, %28 in 0 : vector<1x256xf32>, vector<7x256xf32> -> vector<8x256xf32>
    %c72 = arith.constant 72 : index
    %c0_10 = arith.constant 0 : index
    %30 = vector.load %arg6[%c72, %c0_10] : memref<80x256xf32, #tpu.memory_space<vmem>>, vector<8x256xf32>
    tpu.vector_store %arg6[%c72, %c0_10], %29 {strides = array<i32>} : memref<80x256xf32, #tpu.memory_space<vmem>>, vector<8x256xf32>,
    %c0_11 = arith.constant 0 : index
    %c0_12 = arith.constant 0 : index
    %c0_13 = arith.constant 0 : index
    %31 = vector.load %arg1[%c0_11, %c0_12, %c0_13] : memref<1x4x256xf32, #tpu.memory_space<vmem>>, vector<1x4x256xf32>
    %32 = vector.shape_cast %31 : vector<1x4x256xf32> to vector<4x256xf32>
    %c0_14 = arith.constant 0 : index
    %c128_15 = arith.constant 128 : index
    %33 = vector.load %arg5[%c0_14, %c128_15] : memref<8x512xf32, #tpu.memory_space<vmem>>, vector<4x256xf32>
    tpu.vector_store %arg5[%c0_14, %c128_15], %32 {strides = array<i32>} : memref<8x512xf32, #tpu.memory_space<vmem>>, vector<4x256xf32>,
    %c0_16 = arith.constant 0 : index
    %c111 = arith.constant 111 : index
    %34 = vector.load %arg5[%c0_16, %c111] : memref<8x512xf32, #tpu.memory_space<vmem>>, vector<8x256xf32>
    %cst_17 = arith.constant 0.000000e+00 : f32
    %35 = vector.shape_cast %18 : vector<1x256xi1> to vector<1x256xi1>
    %36 = vector.broadcast %35 : vector<1x256xi1> to vector<8x256xi1>
    %37 = vector.broadcast %cst_17 : f32 to vector<8x256xf32>
    %38 = arith.select %36, %34, %37 : vector<8x256xi1>, vector<8x256xf32>
    %c0_18 = arith.constant 0 : index
    %c0_19 = arith.constant 0 : index
    %39 = vector.load %arg6[%c0_18, %c0_19] : memref<80x256xf32, #tpu.memory_space<vmem>>, vector<8x256xf32>
    tpu.vector_store %arg6[%c0_18, %c0_19], %38 {strides = array<i32>} : memref<80x256xf32, #tpu.memory_space<vmem>>, vector<8x256xf32>,
    %c0_20 = arith.constant 0 : index
    %c112 = arith.constant 112 : index
    %40 = vector.load %arg5[%c0_20, %c112] : memref<8x512xf32, #tpu.memory_space<vmem>>, vector<8x256xf32>
    %c8 = arith.constant 8 : index
    %c0_21 = arith.constant 0 : index
    %41 = vector.load %arg6[%c8, %c0_21] : memref<80x256xf32, #tpu.memory_space<vmem>>, vector<8x256xf32>
    tpu.vector_store %arg6[%c8, %c0_21], %40 {strides = array<i32>} : memref<80x256xf32, #tpu.memory_space<vmem>>, vector<8x256xf32>,
    %c0_22 = arith.constant 0 : index
    %c113 = arith.constant 113 : index
    %42 = vector.load %arg5[%c0_22, %c113] : memref<8x512xf32, #tpu.memory_space<vmem>>, vector<8x256xf32>
    %cst_23 = arith.constant 0.000000e+00 : f32
    %43 = vector.shape_cast %20 : vector<1x256xi1> to vector<1x256xi1>
    %44 = vector.broadcast %43 : vector<1x256xi1> to vector<8x256xi1>
    %45 = vector.broadcast %cst_23 : f32 to vector<8x256xf32>
    %46 = arith.select %44, %42, %45 : vector<8x256xi1>, vector<8x256xf32>
    %c16 = arith.constant 16 : index
    %c0_24 = arith.constant 0 : index
    %47 = vector.load %arg6[%c16, %c0_24] : memref<80x256xf32, #tpu.memory_space<vmem>>, vector<8x256xf32>
    tpu.vector_store %arg6[%c16, %c0_24], %46 {strides = array<i32>} : memref<80x256xf32, #tpu.memory_space<vmem>>, vector<8x256xf32>,
    %c0_25 = arith.constant 0 : index
    %c127 = arith.constant 127 : index
    %48 = vector.load %arg5[%c0_25, %c127] : memref<8x512xf32, #tpu.memory_space<vmem>>, vector<8x256xf32>
    %cst_26 = arith.constant 0.000000e+00 : f32
    %49 = vector.shape_cast %18 : vector<1x256xi1> to vector<1x256xi1>
    %50 = vector.broadcast %49 : vector<1x256xi1> to vector<8x256xi1>
    %51 = vector.broadcast %cst_26 : f32 to vector<8x256xf32>
    %52 = arith.select %50, %48, %51 : vector<8x256xi1>, vector<8x256xf32>
    %c24 = arith.constant 24 : index
    %c0_27 = arith.constant 0 : index
    %53 = vector.load %arg6[%c24, %c0_27] : memref<80x256xf32, #tpu.memory_space<vmem>>, vector<8x256xf32>
    tpu.vector_store %arg6[%c24, %c0_27], %52 {strides = array<i32>} : memref<80x256xf32, #tpu.memory_space<vmem>>, vector<8x256xf32>,
    %c0_28 = arith.constant 0 : index
    %c128_29 = arith.constant 128 : index
    %54 = vector.load %arg5[%c0_28, %c128_29] : memref<8x512xf32, #tpu.memory_space<vmem>>, vector<8x256xf32>
    %c32 = arith.constant 32 : index
    %c0_30 = arith.constant 0 : index
    %55 = vector.load %arg6[%c32, %c0_30] : memref<80x256xf32, #tpu.memory_space<vmem>>, vector<8x256xf32>
    tpu.vector_store %arg6[%c32, %c0_30], %54 {strides = array<i32>} : memref<80x256xf32, #tpu.memory_space<vmem>>, vector<8x256xf32>,
    %c0_31 = arith.constant 0 : index
    %c129 = arith.constant 129 : index
    %56 = vector.load %arg5[%c0_31, %c129] : memref<8x512xf32, #tpu.memory_space<vmem>>, vector<8x256xf32>
    %cst_32 = arith.constant 0.000000e+00 : f32
    %57 = vector.shape_cast %20 : vector<1x256xi1> to vector<1x256xi1>
    %58 = vector.broadcast %57 : vector<1x256xi1> to vector<8x256xi1>
    %59 = vector.broadcast %cst_32 : f32 to vector<8x256xf32>
    %60 = arith.select %58, %56, %59 : vector<8x256xi1>, vector<8x256xf32>
    %c40 = arith.constant 40 : index
    %c0_33 = arith.constant 0 : index
    %61 = vector.load %arg6[%c40, %c0_33] : memref<80x256xf32, #tpu.memory_space<vmem>>, vector<8x256xf32>
    tpu.vector_store %arg6[%c40, %c0_33], %60 {strides = array<i32>} : memref<80x256xf32, #tpu.memory_space<vmem>>, vector<8x256xf32>,
    %c0_34 = arith.constant 0 : index
    %c143 = arith.constant 143 : index
    %62 = vector.load %arg5[%c0_34, %c143] : memref<8x512xf32, #tpu.memory_space<vmem>>, vector<8x256xf32>
    %cst_35 = arith.constant 0.000000e+00 : f32
    %63 = vector.shape_cast %18 : vector<1x256xi1> to vector<1x256xi1>
    %64 = vector.broadcast %63 : vector<1x256xi1> to vector<8x256xi1>
    %65 = vector.broadcast %cst_35 : f32 to vector<8x256xf32>
    %66 = arith.select %64, %62, %65 : vector<8x256xi1>, vector<8x256xf32>
    %c48 = arith.constant 48 : index
    %c0_36 = arith.constant 0 : index
    %67 = vector.load %arg6[%c48, %c0_36] : memref<80x256xf32, #tpu.memory_space<vmem>>, vector<8x256xf32>
    tpu.vector_store %arg6[%c48, %c0_36], %66 {strides = array<i32>} : memref<80x256xf32, #tpu.memory_space<vmem>>, vector<8x256xf32>,
    %c0_37 = arith.constant 0 : index
    %c144 = arith.constant 144 : index
    %68 = vector.load %arg5[%c0_37, %c144] : memref<8x512xf32, #tpu.memory_space<vmem>>, vector<8x256xf32>
    %c56 = arith.constant 56 : index
    %c0_38 = arith.constant 0 : index
    %69 = vector.load %arg6[%c56, %c0_38] : memref<80x256xf32, #tpu.memory_space<vmem>>, vector<8x256xf32>
    tpu.vector_store %arg6[%c56, %c0_38], %68 {strides = array<i32>} : memref<80x256xf32, #tpu.memory_space<vmem>>, vector<8x256xf32>,
    %c0_39 = arith.constant 0 : index
    %c145 = arith.constant 145 : index
    %70 = vector.load %arg5[%c0_39, %c145] : memref<8x512xf32, #tpu.memory_space<vmem>>, vector<8x256xf32>
    %cst_40 = arith.constant 0.000000e+00 : f32
    %71 = vector.shape_cast %20 : vector<1x256xi1> to vector<1x256xi1>
    %72 = vector.broadcast %71 : vector<1x256xi1> to vector<8x256xi1>
    %73 = vector.broadcast %cst_40 : f32 to vector<8x256xf32>
    %74 = arith.select %72, %70, %73 : vector<8x256xi1>, vector<8x256xf32>
    %c64 = arith.constant 64 : index
    %c0_41 = arith.constant 0 : index
    %75 = vector.load %arg6[%c64, %c0_41] : memref<80x256xf32, #tpu.memory_space<vmem>>, vector<8x256xf32>
    tpu.vector_store %arg6[%c64, %c0_41], %74 {strides = array<i32>} : memref<80x256xf32, #tpu.memory_space<vmem>>, vector<8x256xf32>,
    %c0_42 = arith.constant 0 : index
    %c0_43 = arith.constant 0 : index
    %76 = vector.load %arg2[%c0_42, %c0_43] : memref<8x80xf32, #tpu.memory_space<vmem>>, vector<8x80xf32>
    %c0_44 = arith.constant 0 : index
    %c0_45 = arith.constant 0 : index
    %77 = vector.load %arg6[%c0_44, %c0_45] : memref<80x256xf32, #tpu.memory_space<vmem>>, vector<80x256xf32>
    %cst_46 = arith.constant dense<0.000000e+00> : vector<8x256xf32>
    %78 = tpu.matmul %76, %77, %cst_46 {dimension_numbers = #tpu.dot_dimension_numbers<[1], [0], [0], [1], [0, 0, 1, 1], [], []>} : vector<8x80xf32>, vector<80x256xf32>, vector<8x256xf32> -> vector<8x256xf32>
    %cst_47 = arith.constant 0.000000e+00 : f32
    %79 = vector.broadcast %cst_47 : f32 to vector<8x256xf32>
    %80 = arith.maximumf %78, %79 : vector<8x256xf32>
    %c0_48 = arith.constant 0 : index
    %c128_49 = arith.constant 128 : index
    %81 = vector.load %arg5[%c0_48, %c128_49] : memref<8x512xf32, #tpu.memory_space<vmem>>, vector<8x256xf32>
    tpu.vector_store %arg5[%c0_48, %c128_49], %80 {strides = array<i32>} : memref<8x512xf32, #tpu.memory_space<vmem>>, vector<8x256xf32>,
    %c0_50 = arith.constant 0 : index
    %c111_51 = arith.constant 111 : index
    %82 = vector.load %arg5[%c0_50, %c111_51] : memref<8x512xf32, #tpu.memory_space<vmem>>, vector<8x256xf32>
    %cst_52 = arith.constant 0.000000e+00 : f32
    %83 = vector.shape_cast %18 : vector<1x256xi1> to vector<1x256xi1>
    %84 = vector.broadcast %83 : vector<1x256xi1> to vector<8x256xi1>
    %85 = vector.broadcast %cst_52 : f32 to vector<8x256xf32>
    %86 = arith.select %84, %82, %85 : vector<8x256xi1>, vector<8x256xf32>
    %c0_53 = arith.constant 0 : index
    %c0_54 = arith.constant 0 : index
    %87 = vector.load %arg6[%c0_53, %c0_54] : memref<80x256xf32, #tpu.memory_space<vmem>>, vector<8x256xf32>
    tpu.vector_store %arg6[%c0_53, %c0_54], %86 {strides = array<i32>} : memref<80x256xf32, #tpu.memory_space<vmem>>, vector<8x256xf32>,
    %c0_55 = arith.constant 0 : index
    %c112_56 = arith.constant 112 : index
    %88 = vector.load %arg5[%c0_55, %c112_56] : memref<8x512xf32, #tpu.memory_space<vmem>>, vector<8x256xf32>
    %c8_57 = arith.constant 8 : index
    %c0_58 = arith.constant 0 : index
    %89 = vector.load %arg6[%c8_57, %c0_58] : memref<80x256xf32, #tpu.memory_space<vmem>>, vector<8x256xf32>
    tpu.vector_store %arg6[%c8_57, %c0_58], %88 {strides = array<i32>} : memref<80x256xf32, #tpu.memory_space<vmem>>, vector<8x256xf32>,
    %c0_59 = arith.constant 0 : index
    %c113_60 = arith.constant 113 : index
    %90 = vector.load %arg5[%c0_59, %c113_60] : memref<8x512xf32, #tpu.memory_space<vmem>>, vector<8x256xf32>
    %cst_61 = arith.constant 0.000000e+00 : f32
    %91 = vector.shape_cast %20 : vector<1x256xi1> to vector<1x256xi1>
    %92 = vector.broadcast %91 : vector<1x256xi1> to vector<8x256xi1>
    %93 = vector.broadcast %cst_61 : f32 to vector<8x256xf32>
    %94 = arith.select %92, %90, %93 : vector<8x256xi1>, vector<8x256xf32>
    %c16_62 = arith.constant 16 : index
    %c0_63 = arith.constant 0 : index
    %95 = vector.load %arg6[%c16_62, %c0_63] : memref<80x256xf32, #tpu.memory_space<vmem>>, vector<8x256xf32>
    tpu.vector_store %arg6[%c16_62, %c0_63], %94 {strides = array<i32>} : memref<80x256xf32, #tpu.memory_space<vmem>>, vector<8x256xf32>,
    %c0_64 = arith.constant 0 : index
    %c127_65 = arith.constant 127 : index
    %96 = vector.load %arg5[%c0_64, %c127_65] : memref<8x512xf32, #tpu.memory_space<vmem>>, vector<8x256xf32>
    %cst_66 = arith.constant 0.000000e+00 : f32
    %97 = vector.shape_cast %18 : vector<1x256xi1> to vector<1x256xi1>
    %98 = vector.broadcast %97 : vector<1x256xi1> to vector<8x256xi1>
    %99 = vector.broadcast %cst_66 : f32 to vector<8x256xf32>
    %100 = arith.select %98, %96, %99 : vector<8x256xi1>, vector<8x256xf32>
    %c24_67 = arith.constant 24 : index
    %c0_68 = arith.constant 0 : index
    %101 = vector.load %arg6[%c24_67, %c0_68] : memref<80x256xf32, #tpu.memory_space<vmem>>, vector<8x256xf32>
    tpu.vector_store %arg6[%c24_67, %c0_68], %100 {strides = array<i32>} : memref<80x256xf32, #tpu.memory_space<vmem>>, vector<8x256xf32>,
    %c0_69 = arith.constant 0 : index
    %c128_70 = arith.constant 128 : index
    %102 = vector.load %arg5[%c0_69, %c128_70] : memref<8x512xf32, #tpu.memory_space<vmem>>, vector<8x256xf32>
    %c32_71 = arith.constant 32 : index
    %c0_72 = arith.constant 0 : index
    %103 = vector.load %arg6[%c32_71, %c0_72] : memref<80x256xf32, #tpu.memory_space<vmem>>, vector<8x256xf32>
    tpu.vector_store %arg6[%c32_71, %c0_72], %102 {strides = array<i32>} : memref<80x256xf32, #tpu.memory_space<vmem>>, vector<8x256xf32>,
    %c0_73 = arith.constant 0 : index
    %c129_74 = arith.constant 129 : index
    %104 = vector.load %arg5[%c0_73, %c129_74] : memref<8x512xf32, #tpu.memory_space<vmem>>, vector<8x256xf32>
    %cst_75 = arith.constant 0.000000e+00 : f32
    %105 = vector.shape_cast %20 : vector<1x256xi1> to vector<1x256xi1>
    %106 = vector.broadcast %105 : vector<1x256xi1> to vector<8x256xi1>
    %107 = vector.broadcast %cst_75 : f32 to vector<8x256xf32>
    %108 = arith.select %106, %104, %107 : vector<8x256xi1>, vector<8x256xf32>
    %c40_76 = arith.constant 40 : index
    %c0_77 = arith.constant 0 : index
    %109 = vector.load %arg6[%c40_76, %c0_77] : memref<80x256xf32, #tpu.memory_space<vmem>>, vector<8x256xf32>
    tpu.vector_store %arg6[%c40_76, %c0_77], %108 {strides = array<i32>} : memref<80x256xf32, #tpu.memory_space<vmem>>, vector<8x256xf32>,
    %c0_78 = arith.constant 0 : index
    %c143_79 = arith.constant 143 : index
    %110 = vector.load %arg5[%c0_78, %c143_79] : memref<8x512xf32, #tpu.memory_space<vmem>>, vector<8x256xf32>
    %cst_80 = arith.constant 0.000000e+00 : f32
    %111 = vector.shape_cast %18 : vector<1x256xi1> to vector<1x256xi1>
    %112 = vector.broadcast %111 : vector<1x256xi1> to vector<8x256xi1>
    %113 = vector.broadcast %cst_80 : f32 to vector<8x256xf32>
    %114 = arith.select %112, %110, %113 : vector<8x256xi1>, vector<8x256xf32>
    %c48_81 = arith.constant 48 : index
    %c0_82 = arith.constant 0 : index
    %115 = vector.load %arg6[%c48_81, %c0_82] : memref<80x256xf32, #tpu.memory_space<vmem>>, vector<8x256xf32>
    tpu.vector_store %arg6[%c48_81, %c0_82], %114 {strides = array<i32>} : memref<80x256xf32, #tpu.memory_space<vmem>>, vector<8x256xf32>,
    %c0_83 = arith.constant 0 : index
    %c144_84 = arith.constant 144 : index
    %116 = vector.load %arg5[%c0_83, %c144_84] : memref<8x512xf32, #tpu.memory_space<vmem>>, vector<8x256xf32>
    %c56_85 = arith.constant 56 : index
    %c0_86 = arith.constant 0 : index
    %117 = vector.load %arg6[%c56_85, %c0_86] : memref<80x256xf32, #tpu.memory_space<vmem>>, vector<8x256xf32>
    tpu.vector_store %arg6[%c56_85, %c0_86], %116 {strides = array<i32>} : memref<80x256xf32, #tpu.memory_space<vmem>>, vector<8x256xf32>,
    %c0_87 = arith.constant 0 : index
    %c145_88 = arith.constant 145 : index
    %118 = vector.load %arg5[%c0_87, %c145_88] : memref<8x512xf32, #tpu.memory_space<vmem>>, vector<8x256xf32>
    %cst_89 = arith.constant 0.000000e+00 : f32
    %119 = vector.shape_cast %20 : vector<1x256xi1> to vector<1x256xi1>
    %120 = vector.broadcast %119 : vector<1x256xi1> to vector<8x256xi1>
    %121 = vector.broadcast %cst_89 : f32 to vector<8x256xf32>
    %122 = arith.select %120, %118, %121 : vector<8x256xi1>, vector<8x256xf32>
    %c64_90 = arith.constant 64 : index
    %c0_91 = arith.constant 0 : index
    %123 = vector.load %arg6[%c64_90, %c0_91] : memref<80x256xf32, #tpu.memory_space<vmem>>, vector<8x256xf32>
    tpu.vector_store %arg6[%c64_90, %c0_91], %122 {strides = array<i32>} : memref<80x256xf32, #tpu.memory_space<vmem>>, vector<8x256xf32>,
    %c0_92 = arith.constant 0 : index
    %c0_93 = arith.constant 0 : index
    %124 = vector.load %arg3[%c0_92, %c0_93] : memref<8x80xf32, #tpu.memory_space<vmem>>, vector<8x80xf32>
    %c0_94 = arith.constant 0 : index
    %c0_95 = arith.constant 0 : index
    %125 = vector.load %arg6[%c0_94, %c0_95] : memref<80x256xf32, #tpu.memory_space<vmem>>, vector<80x256xf32>
    %cst_96 = arith.constant dense<0.000000e+00> : vector<8x256xf32>
    %126 = tpu.matmul %124, %125, %cst_96 {dimension_numbers = #tpu.dot_dimension_numbers<[1], [0], [0], [1], [0, 0, 1, 1], [], []>} : vector<8x80xf32>, vector<80x256xf32>, vector<8x256xf32> -> vector<8x256xf32>
    %c0_97 = arith.constant 0 : index
    %c0_98 = arith.constant 0 : index
    %c0_99 = arith.constant 0 : index
    %127 = vector.load %arg4[%c0_97, %c0_98, %c0_99] : memref<1x8x256xf32, #tpu.memory_space<vmem>>, vector<1x8x256xf32>
    %128 = vector.shape_cast %127 : vector<1x8x256xf32> to vector<8x256xf32>
    %129 = vector.shape_cast %126 : vector<8x256xf32> to vector<1x8x256xf32>
    tpu.vector_store %arg4[%c0_97, %c0_98, %c0_99], %129 {strides = array<i32>} : memref<1x8x256xf32, #tpu.memory_space<vmem>>, vector<1x8x256xf32>,
    return
  }
  func.func @transform_0(%arg0: i32) -> (i32, i32, i32) {
    %c0_i32 = arith.constant 0 : i32
    %c0_i32_0 = arith.constant 0 : i32
    %c0_i32_1 = arith.constant 0 : i32
    return %arg0, %c0_i32, %c0_i32_0 : i32, i32, i32
  }
  func.func @transform_1(%arg0: i32) -> (i32, i32) {
    %c0_i32 = arith.constant 0 : i32
    %c0_i32_0 = arith.constant 0 : i32
    %c0_i32_1 = arith.constant 0 : i32
    return %c0_i32, %c0_i32_0 : i32, i32
  }
  func.func @transform_2(%arg0: i32) -> (i32, i32) {
    %c0_i32 = arith.constant 0 : i32
    %c0_i32_0 = arith.constant 0 : i32
    %c0_i32_1 = arith.constant 0 : i32
    return %c0_i32, %c0_i32_0 : i32, i32
  }
  func.func @transform_3(%arg0: i32) -> (i32, i32, i32) {
    %c0_i32 = arith.constant 0 : i32
    %c0_i32_0 = arith.constant 0 : i32
    %c0_i32_1 = arith.constant 0 : i32
    return %arg0, %c0_i32, %c0_i32_0 : i32, i32, i32
  }
}

</mosaic_0001>

<llo_original>
// kernel: tpu_custom_call.1
$region0: #{tpu_custom_call.1}
  #allocation0 [shape = 'u32[]', space=smem, size = 0x4, offset = 0x4, fixed_abs, tag = 'smem constant byte address 0x4 - core index']
  #allocation1 [shape = 'u32[144,128]{1,0:T(1,128)}', space=vmem, size = 0x12000, scoped, tag = 'internal scratch']
  #allocation2 [shape = 'f32[8,512]{1,0:T(8,128)}', space=vmem, size = 0x4000, scoped, tag = 'scratch operand']
  #allocation3 [shape = 'f32[80,256]{1,0:T(8,128)}', space=vmem, size = 0x14000, scoped, tag = 'scratch operand']
  %s0 = inlined_call_operand.hbm [shape: f32[2,4,256], index: 0, kind: input, shape index: {}]
  %s1 = inlined_call_operand.hbm [shape: f32[8,80], index: 1, kind: input, shape index: {}]
  %s2 = inlined_call_operand.hbm [shape: f32[8,80], index: 2, kind: input, shape index: {}]
  %s3 = inlined_call_operand.hbm [shape: f32[2,8,256], index: 3, kind: output, shape index: {}]
  %s4 = sld [smem:[#allocation0]]
  $region57: #{tpu_custom_call.1} parent=0
    _
  %s6 = ssub.s32 1, %s4
  %s7 = scalar_select 0, %s6, %s4
  $region1: #{tpu_custom_call.1} parent=0
    #allocation4 [shape = 'u8[8192]{0}', space=vmem, size = 0x2000, scoped, tag = 'input window, operand 0']
    #allocation5 [shape = 's32[2]{0}', space=sflag, size = 0x8, scoped, tag = 'scoped memory for tpu_custom_call.1']
    #allocation6 [shape = 's32[2]{0}', space=sflag, size = 0x8, scoped, tag = 'scoped memory for tpu_custom_call.1']
    #allocation7 [shape = 'u8[4096]{0}', space=vmem, size = 0x1000, scoped, tag = 'input window, operand 1, single buffered']
    #allocation8 [shape = 's32[1]{0}', space=sflag, size = 0x4, scoped, tag = 'scoped memory for tpu_custom_call.1']
    #allocation9 [shape = 'u8[4096]{0}', space=vmem, size = 0x1000, scoped, tag = 'input window, operand 2, single buffered']
    #allocation10 [shape = 'u8[16384]{0}', space=vmem, size = 0x4000, scoped, tag = 'output window, operand 0']
    %8 = vsyncpa [#allocation5], 0
    %s9 = scalar_lea.sflag [#allocation5], 1
    %10 = vsyncpa %s9, 0
    %11 = vsyncpa [#allocation8], 0
    %12 = vsyncpa [#allocation6], 0
    %s13 = scalar_lea.sflag [#allocation6], 1
    %14 = vsyncpa %s13, 0
    loop: start=0, step=1, limit=4
    $region2: #{tpu_custom_call.1} parent=1 // loop_pre_header
      _
    $region3: #{tpu_custom_call.1} parent=1 // loop_header
      %s16 = sphi 0, %s20
      %p17 = scmp.ge.s32.totalorder %s16, 4
      %s26 = sphi 0, %s28
      %s29 = sphi 0, %s26
      %s30 = sphi 0, %s29
      %s46 = sphi 0, %s30
      %s50 = sphi 0, %s50
      %s52 = sphi 0, %s50
      %s53 = sphi 0, %s52
      %s67 = sphi 0, %s53
      %s71 = sphi 0, %s71
      %s73 = sphi 0, %s71
      %s74 = sphi 0, %s73
      %s88 = sphi 0, %s74
      %s94 = sphi 0, %s96
      %s97 = sphi 0, %s94
      %s98 = sphi 0, %s97
      %s114 = sphi 0, %s98
    $region4: #{tpu_custom_call.1} parent=1 // loop_header_branch
      %19 = sbr.rel (%p17) target = $region8
    $region5: #{tpu_custom_call.1} parent=1 // loop_body
      %s21 = ssub.s32 %s16, 1
      %s22 = ssub.s32 %s16, 2
      %s23 = sadd.s32 %s16, 1
      %s24 = ssub.s32 %s16, %s23
      %p25 = scmp.eq.s32.totalorder %s24, 0
      %s27 = sadd.s32 %s26, 1
      %s28 = scalar_select %p25, %s26, %s27
      %p31 = pneg %p25
      %p32 = scmp.eq.s32.totalorder %s16, 1
      %p33 = por %p31, %p32
      %p34 = scmp.ne.s32.totalorder %s26, %s29
      %p35 = scmp.eq.s32.totalorder %s16, 0
      %p36 = por %p34, %p35
      %p37 = scmp.ne.s32.totalorder %s26, %s29
      %p38 = scmp.eq.s32.totalorder %s21, 1
      %p39 = por %p37, %p38
      %p40 = scmp.ne.s32.totalorder %s29, %s30
      %p41 = scmp.eq.s32.totalorder %s21, 0
      %p42 = por %p40, %p41
      %p43 = scmp.ne.s32.totalorder %s29, %s30
      %p44 = scmp.eq.s32.totalorder %s22, 1
      %p45 = por %p43, %p44
      %p47 = scmp.ne.s32.totalorder %s30, %s46
      %p48 = scmp.eq.s32.totalorder %s22, 0
      %p49 = por %p47, %p48
      %s51 = sadd.s32 %s50, 1
      %p54 = scmp.eq.s32.totalorder %s16, 1
      %p55 = scmp.ne.s32.totalorder %s50, %s52
      %p56 = scmp.eq.s32.totalorder %s16, 0
      %p57 = por %p55, %p56
      %p58 = scmp.ne.s32.totalorder %s50, %s52
      %p59 = scmp.eq.s32.totalorder %s21, 1
      %p60 = por %p58, %p59
      %p61 = scmp.ne.s32.totalorder %s52, %s53
      %p62 = scmp.eq.s32.totalorder %s21, 0
      %p63 = por %p61, %p62
      %p64 = scmp.ne.s32.totalorder %s52, %s53
      %p65 = scmp.eq.s32.totalorder %s22, 1
      %p66 = por %p64, %p65
      %p68 = scmp.ne.s32.totalorder %s53, %s67
      %p69 = scmp.eq.s32.totalorder %s22, 0
      %p70 = por %p68, %p69
      %s72 = sadd.s32 %s71, 1
      %p75 = scmp.eq.s32.totalorder %s16, 1
      %p76 = scmp.ne.s32.totalorder %s71, %s73
      %p77 = scmp.eq.s32.totalorder %s16, 0
      %p78 = por %p76, %p77
      %p79 = scmp.ne.s32.totalorder %s71, %s73
      %p80 = scmp.eq.s32.totalorder %s21, 1
      %p81 = por %p79, %p80
      %p82 = scmp.ne.s32.totalorder %s73, %s74
      %p83 = scmp.eq.s32.totalorder %s21, 0
      %p84 = por %p82, %p83
      %p85 = scmp.ne.s32.totalorder %s73, %s74
      %p86 = scmp.eq.s32.totalorder %s22, 1
      %p87 = por %p85, %p86
      %p89 = scmp.ne.s32.totalorder %s74, %s88
      %p90 = scmp.eq.s32.totalorder %s22, 0
      %p91 = por %p89, %p90
      %s92 = ssub.s32 %s16, %s23
      %p93 = scmp.eq.s32.totalorder %s92, 0
      %s95 = sadd.s32 %s94, 1
      %s96 = scalar_select %p93, %s94, %s95
      %p99 = pneg %p93
      %p100 = scmp.eq.s32.totalorder %s16, 1
      %p101 = por %p99, %p100
      %p102 = scmp.ne.s32.totalorder %s94, %s97
      %p103 = scmp.eq.s32.totalorder %s16, 0
      %p104 = por %p102, %p103
      %p105 = scmp.ne.s32.totalorder %s94, %s97
      %p106 = scmp.eq.s32.totalorder %s21, 1
      %p107 = por %p105, %p106
      %p108 = scmp.ne.s32.totalorder %s97, %s98
      %p109 = scmp.eq.s32.totalorder %s21, 0
      %p110 = por %p108, %p109
      %p111 = scmp.ne.s32.totalorder %s97, %s98
      %p112 = scmp.eq.s32.totalorder %s22, 1
      %p113 = por %p111, %p112
      %p115 = scmp.ne.s32.totalorder %s98, %s114
      %p116 = scmp.eq.s32.totalorder %s22, 0
      %p117 = por %p115, %p116
      %p118 = scmp.le.s32.totalorder 1, %s16
      %p119 = scmp.lt.s32.totalorder %s16, 3
      %p120 = pnand %p118, %p119
      %p121 = pneg %p120
      // Predicated region
      $region9: #{tpu_custom_call.1} parent=5 // pred_check
        _
      $region10: #{tpu_custom_call.1} parent=5 // pred_check_branch
        %123 = sbr.rel (%p120) target = $region12
      $region11: #{tpu_custom_call.1} parent=5 // pred_region
        %s124 = ssub.s32 %s16, 1
        // Predicated region
        $region13: #{tpu_custom_call.1} parent=11 // pred_check
          %p125 = pneg %p63
        $region14: #{tpu_custom_call.1} parent=11 // pred_check_branch
          %127 = sbr.rel (%p125) target = $region16
        $region15: #{tpu_custom_call.1} parent=11 // pred_region
          %s129 = ssub.s32 128, 128
          %130 = vsyncadd [#allocation8], %s129
          %s132 = sshll.u32 [#allocation7], 4
          %s133 = int_to_ptr.vmem [resolvable:$true] %s132
          %135 = dma.hbm_to_vmem [thread:$0]  %s1, 128, %s133, [#allocation8]
        $region16: #{tpu_custom_call.1} parent=11 // pred_fallthru
          _
        // Predicated region
        $region17: #{tpu_custom_call.1} parent=11 // pred_check
          %p136 = pneg %p84
        $region18: #{tpu_custom_call.1} parent=11 // pred_check_branch
          %138 = sbr.rel (%p136) target = $region20
        $region19: #{tpu_custom_call.1} parent=11 // pred_region
          %s140 = ssub.s32 128, 128
          %141 = vsyncadd [#allocation8], %s140
          %s143 = sshll.u32 [#allocation9], 4
          %s144 = int_to_ptr.vmem [resolvable:$true] %s143
          %146 = dma.hbm_to_vmem [thread:$0]  %s2, 128, %s144, [#allocation8]
        $region20: #{tpu_custom_call.1} parent=11 // pred_fallthru
          _
      $region12: #{tpu_custom_call.1} parent=5 // pred_fallthru
        _
      %p147 = scmp.lt.s32.totalorder %s16, 2
      // Predicated region
      $region21: #{tpu_custom_call.1} parent=5 // pred_check
        %p148 = pneg %p147
      $region22: #{tpu_custom_call.1} parent=5 // pred_check_branch
        %150 = sbr.rel (%p148) target = $region24
      $region23: #{tpu_custom_call.1} parent=5 // pred_region
        // Predicated region
        $region25: #{tpu_custom_call.1} parent=23 // pred_check
          %p151 = pneg %p36
        $region26: #{tpu_custom_call.1} parent=23 // pred_check_branch
          %153 = sbr.rel (%p151) target = $region28
        $region27: #{tpu_custom_call.1} parent=23 // pred_region
          %s154 = sand.u32 %s26, 1
          %s155 = scalar_lea.sflag [#allocation5], %s154
          %s156 = sand.u32 %s26, 1
          %s157 = smul.addr %s156, 8
          %s158 = scalar_lea.vmem [#allocation4], %s157
          %s160 = ssub.s32 128, 128
          %161 = vsyncadd %s155, %s160
          %s162 = smul.addr %s16, 2
          %s163 = smul.addr %s162, 64
          %s164 = scalar_lea.hbm %s0, %s163
          %s166 = sshll.u32 %s158, 4
          %s167 = int_to_ptr.vmem [resolvable:$true] %s166
          %169 = dma.hbm_to_vmem [thread:$0]  %s164, 128, %s167, %s155
        $region28: #{tpu_custom_call.1} parent=23 // pred_fallthru
          _
      $region24: #{tpu_custom_call.1} parent=5 // pred_fallthru
        _
      %p170 = scmp.le.s32.totalorder 1, %s16
      %p171 = scmp.lt.s32.totalorder %s16, 3
      %p172 = pnand %p170, %p171
      %p173 = pneg %p172
      // Predicated region
      $region29: #{tpu_custom_call.1} parent=5 // pred_check
        _
      $region30: #{tpu_custom_call.1} parent=5 // pred_check_branch
        %175 = sbr.rel (%p172) target = $region32
      $region31: #{tpu_custom_call.1} parent=5 // pred_region
        %s176 = ssub.s32 %s16, 1
        %s177 = sand.u32 %s29, 1
        %s178 = scalar_lea.sflag [#allocation5], %s177
        %s179 = sand.u32 %s29, 1
        %s180 = smul.addr %s179, 8
        %s181 = scalar_lea.vmem [#allocation4], %s180
        // Predicated region
        $region33: #{tpu_custom_call.1} parent=31 // pred_check
          %p182 = pneg %p42
        $region34: #{tpu_custom_call.1} parent=31 // pred_check_branch
          %184 = sbr.rel (%p182) target = $region36
        $region35: #{tpu_custom_call.1} parent=31 // pred_region
          %185 = dma.done %s178, 128
        $region36: #{tpu_custom_call.1} parent=31 // pred_fallthru
          _
        // Predicated region
        $region37: #{tpu_custom_call.1} parent=31 // pred_check
          %p186 = pneg %p63
        $region38: #{tpu_custom_call.1} parent=31 // pred_check_branch
          %188 = sbr.rel (%p186) target = $region40
        $region39: #{tpu_custom_call.1} parent=31 // pred_region
          %189 = dma.done [#allocation8], 128
        $region40: #{tpu_custom_call.1} parent=31 // pred_fallthru
          _
        // Predicated region
        $region41: #{tpu_custom_call.1} parent=31 // pred_check
          %p190 = pneg %p84
        $region42: #{tpu_custom_call.1} parent=31 // pred_check_branch
          %192 = sbr.rel (%p190) target = $region44
        $region43: #{tpu_custom_call.1} parent=31 // pred_region
          %193 = dma.done [#allocation8], 128
        $region44: #{tpu_custom_call.1} parent=31 // pred_fallthru
          _
        %s194 = sand.u32 %s29, 1
        %s195 = scalar_lea.sflag [#allocation5], %s194
        %s196 = sand.u32 %s29, 1
        %s197 = smul.addr %s196, 8
        %s198 = scalar_lea.vmem [#allocation4], %s197
        %p199 = pneg %p42
        %p200 = pneg %p39
        %p201 = pneg %p63
        %p202 = pneg %p60
        %p203 = pneg %p84
        %p204 = pneg %p81
        %p205 = pneg %p110
        %p206 = pneg %p107
        %s207 = sand.u32 %s97, 1
        %s208 = scalar_lea.sflag [#allocation6], %s207
        %s209 = sand.u32 %s97, 1
        %s210 = smul.addr %s209, 16
        %s211 = scalar_lea.vmem [#allocation10], %s210
        %v212 = vlaneseq
        %v213 = vand.u32 %v212, 127
        %v214 = vadd.s32 %v213, 128
        %vm215 = vcmp.lt.s32.totalorder %v213, 0
        %v216 = vsub.s32 0, %v213
        %v217 = vsel %vm215, %v216, %v213
        %v218 = vshrl.u32 %v217, 4
        %v219 = vand.u32 %v217, 15
        %v220 = vsub.s32 0, %v219
        %v221 = vsel %vm215, %v220, %v219
        %vm222 = vcmp.lt.s32.totalorder %v214, 0
        %v223 = vsub.s32 0, %v214
        %v224 = vsel %vm222, %v223, %v214
        %v225 = vshrl.u32 %v224, 4
        %v226 = vand.u32 %v224, 15
        %v227 = vsub.s32 0, %v226
        %v228 = vsel %vm222, %v227, %v226
        %vm229 = vcmp.ne.s32.totalorder %v221, 0
        %vm230 = vcmp.ne.s32.totalorder %v228, 0
        %vm231 = vcmp.lt.s32.totalorder %v221, 0
        %vm232 = vcmp.lt.s32.totalorder %v228, 0
        %vm233 = vmand %vm231, %vm229
        %vm234 = vmand %vm232, %vm230
        %v235 = vadd.s32 %v221, 16
        %v236 = vadd.s32 %v228, 16
        %v237 = vsel %vm233, %v235, %v221
        %v238 = vsel %vm234, %v236, %v228
        %vm239 = vcmp.ge.s32.totalorder %v237, 1
        %vm240 = vcmp.ge.s32.totalorder %v238, 1
        %vm241 = vcmp.le.s32.totalorder %v237, 14
        %vm242 = vcmp.le.s32.totalorder %v238, 14
        %243 = vst [vmem:[#allocation2] sm:$0xff] 0.0
        %244 = vst [vmem:[#allocation2 + $0x18] sm:$0xff] 0.0
        %245 = vst [vmem:[#allocation2 + $0x8] sm:$0xf0] 0.0
        %246 = vst [vmem:[#allocation2 + $0x10] sm:$0xf0] 0.0
        %vm247 = vcmask 1040384
        %v248 = vsel %vm247, 1.0, 0.0
        %249 = vst [vmem:[#allocation3 + $0x90] sm:$0xff] %v248
        %250 = vst [vmem:[#allocation3 + $0x98] sm:$0xff] %v248
        %v251 = vld [vmem:[%s181] sm:$0xff]
        %v253 = vcombine.high %v251, %v251
        %255 = vst [vmem:[#allocation2 + $0x8] sm:$0xf] %v251
        %256 = vst [vmem:[#allocation2 + $0x10] sm:$0xf] %v253
        %v257 = vld [vmem:[#allocation2] sm:$0xff]
        %v258 = vld [vmem:[#allocation2 + $0x8] sm:$0xff]
        %v259 = vld [vmem:[#allocation2 + $0x10] sm:$0xff]
        %v260 = vsel %vm239, 1, 0
        %v261 = vsel %vm240, 1, 0
        %vm262 = vcmp.eq.s32.totalorder %v260, 1
        %vm263 = vcmp.eq.s32.totalorder %v261, 1
        %267 = vrot.lane.b32.xlu0 %v257, 17
        %v268 = vpop.permute.xlu0 %267
        %269 = vrot.lane.b32.xlu0 %v258, 17
        %v270 = vpop.permute.xlu0 %269
        %271 = vrot.lane.b32.xlu0 %v259, 17
        %v272 = vpop.permute.xlu0 %271
        %vm273 = vcmask 138240
        %v274 = vsel %vm273, %v268, %v270
        %v275 = vsel %vm273, %v270, %v272
        %v278 = vsel %vm262, %v274, 0.0
        %v279 = vsel %vm263, %v275, 0.0
        %280 = vst [vmem:[#allocation3] sm:$0xff] %v278
        %281 = vst [vmem:[#allocation3 + $0x8] sm:$0xff] %v279
        %v282 = vld [vmem:[#allocation2] sm:$0xff]
        %v283 = vld [vmem:[#allocation2 + $0x8] sm:$0xff]
        %v284 = vld [vmem:[#allocation2 + $0x10] sm:$0xff]
        %288 = vrot.lane.b32.xlu0 %v282, 16
        %v289 = vpop.permute.xlu0 %288
        %290 = vrot.lane.b32.xlu0 %v283, 16
        %v291 = vpop.permute.xlu0 %290
        %292 = vrot.lane.b32.xlu0 %v284, 16
        %v293 = vpop.permute.xlu0 %292
        %vm294 = vcmask 130048
        %v295 = vsel %vm294, %v289, %v291
        %v296 = vsel %vm294, %v291, %v293
        %299 = vst [vmem:[#allocation3 + $0x10] sm:$0xff] %v295
        %300 = vst [vmem:[#allocation3 + $0x18] sm:$0xff] %v296
        %v301 = vld [vmem:[#allocation2] sm:$0xff]
        %v302 = vld [vmem:[#allocation2 + $0x8] sm:$0xff]
        %v303 = vld [vmem:[#allocation2 + $0x10] sm:$0xff]
        %v304 = vsel %vm241, 1, 0
        %v305 = vsel %vm242, 1, 0
        %vm306 = vcmp.eq.s32.totalorder %v304, 1
        %vm307 = vcmp.eq.s32.totalorder %v305, 1
        %311 = vrot.lane.b32.xlu0 %v301, 15
        %v312 = vpop.permute.xlu0 %311
        %313 = vrot.lane.b32.xlu0 %v302, 15
        %v314 = vpop.permute.xlu0 %313
        %315 = vrot.lane.b32.xlu0 %v303, 15
        %v316 = vpop.permute.xlu0 %315
        %vm317 = vcmask 121856
        %v318 = vsel %vm317, %v312, %v314
        %v319 = vsel %vm317, %v314, %v316
        %v322 = vsel %vm306, %v318, 0.0
        %v323 = vsel %vm307, %v319, 0.0
        %324 = vst [vmem:[#allocation3 + $0x20] sm:$0xff] %v322
        %325 = vst [vmem:[#allocation3 + $0x28] sm:$0xff] %v323
        %v326 = vld [vmem:[#allocation2] sm:$0xff]
        %v327 = vld [vmem:[#allocation2 + $0x8] sm:$0xff]
        %v328 = vld [vmem:[#allocation2 + $0x10] sm:$0xff]
        %332 = vrot.lane.b32.xlu0 %v326, 1
        %v333 = vpop.permute.xlu0 %332
        %334 = vrot.lane.b32.xlu0 %v327, 1
        %v335 = vpop.permute.xlu0 %334
        %336 = vrot.lane.b32.xlu0 %v328, 1
        %v337 = vpop.permute.xlu0 %336
        %vm338 = vcmask 7168
        %v339 = vsel %vm338, %v333, %v335
        %v340 = vsel %vm338, %v335, %v337
        %v343 = vsel %vm262, %v339, 0.0
        %v344 = vsel %vm263, %v340, 0.0
        %345 = vst [vmem:[#allocation3 + $0x30] sm:$0xff] %v343
        %346 = vst [vmem:[#allocation3 + $0x38] sm:$0xff] %v344
        %v347 = vld [vmem:[#allocation2 + $0x8] sm:$0xff]
        %v348 = vld [vmem:[#allocation2 + $0x10] sm:$0xff]
        %349 = vst [vmem:[#allocation3 + $0x40] sm:$0xff] %v347
        %350 = vst [vmem:[#allocation3 + $0x48] sm:$0xff] %v348
        %v351 = vld [vmem:[#allocation2 + $0x8] sm:$0xff]
        %v352 = vld [vmem:[#allocation2 + $0x10] sm:$0xff]
        %v353 = vld [vmem:[#allocation2 + $0x18] sm:$0xff]
        %357 = vrot.lane.b32.xlu0 %v351, 127
        %v358 = vpop.permute.xlu0 %357
        %359 = vrot.lane.b32.xlu0 %v352, 127
        %v360 = vpop.permute.xlu0 %359
        %361 = vrot.lane.b32.xlu0 %v353, 127
        %v362 = vpop.permute.xlu0 %361
        %vm363 = vcmask 1039360
        %v364 = vsel %vm363, %v358, %v360
        %v365 = vsel %vm363, %v360, %v362
        %v368 = vsel %vm306, %v364, 0.0
        %v369 = vsel %vm307, %v365, 0.0
        %370 = vst [vmem:[#allocation3 + $0x50] sm:$0xff] %v368
        %371 = vst [vmem:[#allocation3 + $0x58] sm:$0xff] %v369
        %v372 = vld [vmem:[#allocation2 + $0x8] sm:$0xff]
        %v373 = vld [vmem:[#allocation2 + $0x10] sm:$0xff]
        %v374 = vld [vmem:[#allocation2 + $0x18] sm:$0xff]
        %378 = vrot.lane.b32.xlu0 %v372, 113
        %v379 = vpop.permute.xlu0 %378
        %380 = vrot.lane.b32.xlu0 %v373, 113
        %v381 = vpop.permute.xlu0 %380
        %382 = vrot.lane.b32.xlu0 %v374, 113
        %v383 = vpop.permute.xlu0 %382
        %vm384 = vcmask 924672
        %v385 = vsel %vm384, %v379, %v381
        %v386 = vsel %vm384, %v381, %v383
        %v389 = vsel %vm262, %v385, 0.0
        %v390 = vsel %vm263, %v386, 0.0
        %391 = vst [vmem:[#allocation3 + $0x60] sm:$0xff] %v389
        %392 = vst [vmem:[#allocation3 + $0x68] sm:$0xff] %v390
        %v393 = vld [vmem:[#allocation2 + $0x8] sm:$0xff]
        %v394 = vld [vmem:[#allocation2 + $0x10] sm:$0xff]
        %v395 = vld [vmem:[#allocation2 + $0x18] sm:$0xff]
        %399 = vrot.lane.b32.xlu0 %v393, 112
        %v400 = vpop.permute.xlu0 %399
        %401 = vrot.lane.b32.xlu0 %v394, 112
        %v402 = vpop.permute.xlu0 %401
        %403 = vrot.lane.b32.xlu0 %v395, 112
        %v404 = vpop.permute.xlu0 %403
        %vm405 = vcmask 916480
        %v406 = vsel %vm405, %v400, %v402
        %v407 = vsel %vm405, %v402, %v404
        %410 = vst [vmem:[#allocation3 + $0x70] sm:$0xff] %v406
        %411 = vst [vmem:[#allocation3 + $0x78] sm:$0xff] %v407
        %v412 = vld [vmem:[#allocation2 + $0x8] sm:$0xff]
        %v413 = vld [vmem:[#allocation2 + $0x10] sm:$0xff]
        %v414 = vld [vmem:[#allocation2 + $0x18] sm:$0xff]
        %418 = vrot.lane.b32.xlu0 %v412, 111
        %v419 = vpop.permute.xlu0 %418
        %420 = vrot.lane.b32.xlu0 %v413, 111
        %v421 = vpop.permute.xlu0 %420
        %422 = vrot.lane.b32.xlu0 %v414, 111
        %v423 = vpop.permute.xlu0 %422
        %vm424 = vcmask 908288
        %v425 = vsel %vm424, %v419, %v421
        %v426 = vsel %vm424, %v421, %v423
        %v429 = vsel %vm306, %v425, 0.0
        %v430 = vsel %vm307, %v426, 0.0
        %431 = vst [vmem:[#allocation3 + $0x80] sm:$0xff] %v429
        %432 = vst [vmem:[#allocation3 + $0x88] sm:$0xff] %v430
        %v433 = vld [vmem:[#allocation7] sm:$0xff]
        %v434 = vld [vmem:[#allocation3] sm:$0xff]
        %v435 = vld [vmem:[#allocation3 + $0x8] sm:$0xff]
        %v436 = vld [vmem:[#allocation3 + $0x10] sm:$0xff]
        %v437 = vld [vmem:[#allocation3 + $0x18] sm:$0xff]
        %v438 = vld [vmem:[#allocation3 + $0x20] sm:$0xff]
        %v439 = vld [vmem:[#allocation3 + $0x28] sm:$0xff]
        %v440 = vld [vmem:[#allocation3 + $0x30] sm:$0xff]
        %v441 = vld [vmem:[#allocation3 + $0x38] sm:$0xff]
        %v442 = vld [vmem:[#allocation3 + $0x40] sm:$0xff]
        %v443 = vld [vmem:[#allocation3 + $0x48] sm:$0xff]
        %v444 = vld [vmem:[#allocation3 + $0x50] sm:$0xff]
        %v445 = vld [vmem:[#allocation3 + $0x58] sm:$0xff]
        %v446 = vld [vmem:[#allocation3 + $0x60] sm:$0xff]
        %v447 = vld [vmem:[#allocation3 + $0x68] sm:$0xff]
        %v448 = vld [vmem:[#allocation3 + $0x70] sm:$0xff]
        %v449 = vld [vmem:[#allocation3 + $0x78] sm:$0xff]
        %v450 = vld [vmem:[#allocation3 + $0x80] sm:$0xff]
        %v451 = vld [vmem:[#allocation3 + $0x88] sm:$0xff]
        %v452 = vld [vmem:[#allocation3 + $0x90] sm:$0xff]
        %v453 = vld [vmem:[#allocation3 + $0x98] sm:$0xff]
        %vm454 = vcmask 654336
        %v456 = vsel %vm454, %v433, 0
        %458 = vmatprep.subr.mxu0 0.0
        %459 = vmatpush1.msra.mxu0 0.0
        %460 = vmatprep.subr.mxu0 0.0
        %461 = vmatpush1.msra.mxu0 0.0
        %462 = vmatprep.subr.mxu0 0.0
        %463 = vmatpush1.msra.mxu0 0.0
        %464 = vmatprep.subr.mxu0 0.0
        %465 = vmatpush1.msra.mxu0 0.0
        %466 = vmatprep.subr.mxu0 0.0
        %467 = vmatpush1.msra.mxu0 0.0
        %468 = vmatprep.subr.mxu0 0.0
        %469 = vmatpush1.msra.mxu0 0.0
        %470 = vmatprep.subr.mxu0 %v453
        %471 = vmatpush1.msra.mxu0 %v452
        %472 = vmatprep.subr.mxu0 %v451
        %473 = vmatpush1.msra.mxu0 %v450
        %474 = vmatprep.subr.mxu0 %v449
        %475 = vmatpush1.msra.mxu0 %v448
        %476 = vmatprep.subr.mxu0 %v447
        %477 = vmatpush1.msra.mxu0 %v446
        %478 = vmatprep.subr.mxu0 %v445
        %479 = vmatpush1.msra.mxu0 %v444
        %480 = vmatprep.subr.mxu0 %v443
        %481 = vmatpush1.msra.mxu0 %v442
        %482 = vmatprep.subr.mxu0 %v441
        %483 = vmatpush1.msra.mxu0 %v440
        %484 = vmatprep.subr.mxu0 %v439
        %485 = vmatpush1.msra.mxu0 %v438
        %486 = vmatprep.subr.mxu0 %v437
        %487 = vmatpush1.msra.mxu0 %v436
        %488 = vmatprep.subr.mxu0 %v435
        %489 = vmatpush1.msra.mxu0 %v434
        %490 = vmatprep.subr.mxu0 0.0
        %491 = vmatpush2.msra.mxu0 0.0
        %492 = vmatprep.subr.mxu0 0.0
        %493 = vmatpush2.msra.mxu0 0.0
        %494 = vmatprep.subr.mxu0 0.0
        %495 = vmatpush2.msra.mxu0 0.0
        %496 = vmatprep.subr.mxu0 0.0
        %497 = vmatpush2.msra.mxu0 0.0
        %498 = vmatprep.subr.mxu0 0.0
        %499 = vmatpush2.msra.mxu0 0.0
        %500 = vmatprep.subr.mxu0 0.0
        %501 = vmatpush2.msra.mxu0 0.0
        %502 = vmatprep.subr.mxu0 0.0
        %503 = vmatpush2.msra.mxu0 0.0
        %504 = vmatprep.subr.mxu0 0.0
        %505 = vmatpush2.msra.mxu0 0.0
        %506 = vmatprep.subr.mxu0 0.0
        %507 = vmatpush2.msra.mxu0 0.0
        %508 = vmatprep.subr.mxu0 0.0
        %509 = vmatpush2.msra.mxu0 0.0
        %510 = vmatprep.subr.mxu0 0.0
        %511 = vmatpush2.msra.mxu0 0.0
        %512 = vmatprep.subr.mxu0 0.0
        %513 = vmatpush2.msra.mxu0 0.0
        %514 = vmatprep.subr.mxu0 0.0
        %515 = vmatpush2.msra.mxu0 0.0
        %516 = vmatprep.subr.mxu0 0.0
        %517 = vmatpush2.msra.mxu0 0.0
        %518 = vmatprep.subr.mxu0 0.0
        %519 = vmatpush2.msra.mxu0 0.0
        %520 = vmatprep.subr.mxu0 0.0
        %521 = vmatpush2.msra.mxu0 0.0
        %522 = vmatprep.mubr.f32.mxu0 0.0
        %523 = vmatmul.mubr.f32.gmra.mxu0 %v456
        %v524 = vpop.f32.mrf.mxu0
        %v525 = vadd.f32 0.0, %v524
        %v526 = vpop.f32.mrf.mxu0
        %v527 = vadd.f32 0.0, %v526
        %528 = vdwg.mxu0
        %v529 = vmax.f32 %v525, 0.0
        %v530 = vmax.f32 %v527, 0.0
        %531 = vst [vmem:[#allocation2 + $0x8] sm:$0xff] %v529
        %532 = vst [vmem:[#allocation2 + $0x10] sm:$0xff] %v530
        %v533 = vld [vmem:[#allocation2] sm:$0xff]
        %v534 = vld [vmem:[#allocation2 + $0x8] sm:$0xff]
        %v535 = vld [vmem:[#allocation2 + $0x10] sm:$0xff]
        %539 = vrot.lane.b32.xlu0 %v533, 17
        %v540 = vpop.permute.xlu0 %539
        %541 = vrot.lane.b32.xlu0 %v534, 17
        %v542 = vpop.permute.xlu0 %541
        %543 = vrot.lane.b32.xlu0 %v535, 17
        %v544 = vpop.permute.xlu0 %543
        %v545 = vsel %vm273, %v540, %v542
        %v546 = vsel %vm273, %v542, %v544
        %v549 = vsel %vm262, %v545, 0.0
        %v550 = vsel %vm263, %v546, 0.0
        %551 = vst [vmem:[#allocation3] sm:$0xff] %v549
        %552 = vst [vmem:[#allocation3 + $0x8] sm:$0xff] %v550
        %v553 = vld [vmem:[#allocation2] sm:$0xff]
        %v554 = vld [vmem:[#allocation2 + $0x8] sm:$0xff]
        %v555 = vld [vmem:[#allocation2 + $0x10] sm:$0xff]
        %559 = vrot.lane.b32.xlu0 %v553, 16
        %v560 = vpop.permute.xlu0 %559
        %561 = vrot.lane.b32.xlu0 %v554, 16
        %v562 = vpop.permute.xlu0 %561
        %563 = vrot.lane.b32.xlu0 %v555, 16
        %v564 = vpop.permute.xlu0 %563
        %v565 = vsel %vm294, %v560, %v562
        %v566 = vsel %vm294, %v562, %v564
        %569 = vst [vmem:[#allocation3 + $0x10] sm:$0xff] %v565
        %570 = vst [vmem:[#allocation3 + $0x18] sm:$0xff] %v566
        %v571 = vld [vmem:[#allocation2] sm:$0xff]
        %v572 = vld [vmem:[#allocation2 + $0x8] sm:$0xff]
        %v573 = vld [vmem:[#allocation2 + $0x10] sm:$0xff]
        %577 = vrot.lane.b32.xlu0 %v571, 15
        %v578 = vpop.permute.xlu0 %577
        %579 = vrot.lane.b32.xlu0 %v572, 15
        %v580 = vpop.permute.xlu0 %579
        %581 = vrot.lane.b32.xlu0 %v573, 15
        %v582 = vpop.permute.xlu0 %581
        %v583 = vsel %vm317, %v578, %v580
        %v584 = vsel %vm317, %v580, %v582
        %v587 = vsel %vm306, %v583, 0.0
        %v588 = vsel %vm307, %v584, 0.0
        %589 = vst [vmem:[#allocation3 + $0x20] sm:$0xff] %v587
        %590 = vst [vmem:[#allocation3 + $0x28] sm:$0xff] %v588
        %v591 = vld [vmem:[#allocation2] sm:$0xff]
        %v592 = vld [vmem:[#allocation2 + $0x8] sm:$0xff]
        %v593 = vld [vmem:[#allocation2 + $0x10] sm:$0xff]
        %597 = vrot.lane.b32.xlu0 %v591, 1
        %v598 = vpop.permute.xlu0 %597
        %599 = vrot.lane.b32.xlu0 %v592, 1
        %v600 = vpop.permute.xlu0 %599
        %601 = vrot.lane.b32.xlu0 %v593, 1
        %v602 = vpop.permute.xlu0 %601
        %v603 = vsel %vm338, %v598, %v600
        %v604 = vsel %vm338, %v600, %v602
        %v607 = vsel %vm262, %v603, 0.0
        %v608 = vsel %vm263, %v604, 0.0
        %609 = vst [vmem:[#allocation3 + $0x30] sm:$0xff] %v607
        %610 = vst [vmem:[#allocation3 + $0x38] sm:$0xff] %v608
        %v611 = vld [vmem:[#allocation2 + $0x8] sm:$0xff]
        %v612 = vld [vmem:[#allocation2 + $0x10] sm:$0xff]
        %613 = vst [vmem:[#allocation3 + $0x40] sm:$0xff] %v611
        %614 = vst [vmem:[#allocation3 + $0x48] sm:$0xff] %v612
        %v615 = vld [vmem:[#allocation2 + $0x8] sm:$0xff]
        %v616 = vld [vmem:[#allocation2 + $0x10] sm:$0xff]
        %v617 = vld [vmem:[#allocation2 + $0x18] sm:$0xff]
        %621 = vrot.lane.b32.xlu0 %v615, 127
        %v622 = vpop.permute.xlu0 %621
        %623 = vrot.lane.b32.xlu0 %v616, 127
        %v624 = vpop.permute.xlu0 %623
        %625 = vrot.lane.b32.xlu0 %v617, 127
        %v626 = vpop.permute.xlu0 %625
        %v627 = vsel %vm363, %v622, %v624
        %v628 = vsel %vm363, %v624, %v626
        %v631 = vsel %vm306, %v627, 0.0
        %v632 = vsel %vm307, %v628, 0.0
        %633 = vst [vmem:[#allocation3 + $0x50] sm:$0xff] %v631
        %634 = vst [vmem:[#allocation3 + $0x58] sm:$0xff] %v632
        %v635 = vld [vmem:[#allocation2 + $0x8] sm:$0xff]
        %v636 = vld [vmem:[#allocation2 + $0x10] sm:$0xff]
        %v637 = vld [vmem:[#allocation2 + $0x18] sm:$0xff]
        %641 = vrot.lane.b32.xlu0 %v635, 113
        %v642 = vpop.permute.xlu0 %641
        %643 = vrot.lane.b32.xlu0 %v636, 113
        %v644 = vpop.permute.xlu0 %643
        %645 = vrot.lane.b32.xlu0 %v637, 113
        %v646 = vpop.permute.xlu0 %645
        %v647 = vsel %vm384, %v642, %v644
        %v648 = vsel %vm384, %v644, %v646
        %v651 = vsel %vm262, %v647, 0.0
        %v652 = vsel %vm263, %v648, 0.0
        %653 = vst [vmem:[#allocation3 + $0x60] sm:$0xff] %v651
        %654 = vst [vmem:[#allocation3 + $0x68] sm:$0xff] %v652
        %v655 = vld [vmem:[#allocation2 + $0x8] sm:$0xff]
        %v656 = vld [vmem:[#allocation2 + $0x10] sm:$0xff]
        %v657 = vld [vmem:[#allocation2 + $0x18] sm:$0xff]
        %661 = vrot.lane.b32.xlu0 %v655, 112
        %v662 = vpop.permute.xlu0 %661
        %663 = vrot.lane.b32.xlu0 %v656, 112
        %v664 = vpop.permute.xlu0 %663
        %665 = vrot.lane.b32.xlu0 %v657, 112
        %v666 = vpop.permute.xlu0 %665
        %v667 = vsel %vm405, %v662, %v664
        %v668 = vsel %vm405, %v664, %v666
        %671 = vst [vmem:[#allocation3 + $0x70] sm:$0xff] %v667
        %672 = vst [vmem:[#allocation3 + $0x78] sm:$0xff] %v668
        %v673 = vld [vmem:[#allocation2 + $0x8] sm:$0xff]
        %v674 = vld [vmem:[#allocation2 + $0x10] sm:$0xff]
        %v675 = vld [vmem:[#allocation2 + $0x18] sm:$0xff]
        %679 = vrot.lane.b32.xlu0 %v673, 111
        %v680 = vpop.permute.xlu0 %679
        %681 = vrot.lane.b32.xlu0 %v674, 111
        %v682 = vpop.permute.xlu0 %681
        %683 = vrot.lane.b32.xlu0 %v675, 111
        %v684 = vpop.permute.xlu0 %683
        %v685 = vsel %vm424, %v680, %v682
        %v686 = vsel %vm424, %v682, %v684
        %v689 = vsel %vm306, %v685, 0.0
        %v690 = vsel %vm307, %v686, 0.0
        %691 = vst [vmem:[#allocation3 + $0x80] sm:$0xff] %v689
        %692 = vst [vmem:[#allocation3 + $0x88] sm:$0xff] %v690
        %v693 = vld [vmem:[#allocation9] sm:$0xff]
        %v694 = vld [vmem:[#allocation3] sm:$0xff]
        %v695 = vld [vmem:[#allocation3 + $0x8] sm:$0xff]
        %v696 = vld [vmem:[#allocation3 + $0x10] sm:$0xff]
        %v697 = vld [vmem:[#allocation3 + $0x18] sm:$0xff]
        %v698 = vld [vmem:[#allocation3 + $0x20] sm:$0xff]
        %v699 = vld [vmem:[#allocation3 + $0x28] sm:$0xff]
        %v700 = vld [vmem:[#allocation3 + $0x30] sm:$0xff]
        %v701 = vld [vmem:[#allocation3 + $0x38] sm:$0xff]
        %v702 = vld [vmem:[#allocation3 + $0x40] sm:$0xff]
        %v703 = vld [vmem:[#allocation3 + $0x48] sm:$0xff]
        %v704 = vld [vmem:[#allocation3 + $0x50] sm:$0xff]
        %v705 = vld [vmem:[#allocation3 + $0x58] sm:$0xff]
        %v706 = vld [vmem:[#allocation3 + $0x60] sm:$0xff]
        %v707 = vld [vmem:[#allocation3 + $0x68] sm:$0xff]
        %v708 = vld [vmem:[#allocation3 + $0x70] sm:$0xff]
        %v709 = vld [vmem:[#allocation3 + $0x78] sm:$0xff]
        %v710 = vld [vmem:[#allocation3 + $0x80] sm:$0xff]
        %v711 = vld [vmem:[#allocation3 + $0x88] sm:$0xff]
        %v712 = vld [vmem:[#allocation3 + $0x90] sm:$0xff]
        %v713 = vld [vmem:[#allocation3 + $0x98] sm:$0xff]
        %v715 = vsel %vm454, %v693, 0
        %717 = vmatprep.subr.mxu0 0.0
        %718 = vmatpush1.msra.mxu0 0.0
        %719 = vmatprep.subr.mxu0 0.0
        %720 = vmatpush1.msra.mxu0 0.0
        %721 = vmatprep.subr.mxu0 0.0
        %722 = vmatpush1.msra.mxu0 0.0
        %723 = vmatprep.subr.mxu0 0.0
        %724 = vmatpush1.msra.mxu0 0.0
        %725 = vmatprep.subr.mxu0 0.0
        %726 = vmatpush1.msra.mxu0 0.0
        %727 = vmatprep.subr.mxu0 0.0
        %728 = vmatpush1.msra.mxu0 0.0
        %729 = vmatprep.subr.mxu0 %v713
        %730 = vmatpush1.msra.mxu0 %v712
        %731 = vmatprep.subr.mxu0 %v711
        %732 = vmatpush1.msra.mxu0 %v710
        %733 = vmatprep.subr.mxu0 %v709
        %734 = vmatpush1.msra.mxu0 %v708
        %735 = vmatprep.subr.mxu0 %v707
        %736 = vmatpush1.msra.mxu0 %v706
        %737 = vmatprep.subr.mxu0 %v705
        %738 = vmatpush1.msra.mxu0 %v704
        %739 = vmatprep.subr.mxu0 %v703
        %740 = vmatpush1.msra.mxu0 %v702
        %741 = vmatprep.subr.mxu0 %v701
        %742 = vmatpush1.msra.mxu0 %v700
        %743 = vmatprep.subr.mxu0 %v699
        %744 = vmatpush1.msra.mxu0 %v698
        %745 = vmatprep.subr.mxu0 %v697
        %746 = vmatpush1.msra.mxu0 %v696
        %747 = vmatprep.subr.mxu0 %v695
        %748 = vmatpush1.msra.mxu0 %v694
        %749 = vmatprep.subr.mxu0 0.0
        %750 = vmatpush2.msra.mxu0 0.0
        %751 = vmatprep.subr.mxu0 0.0
        %752 = vmatpush2.msra.mxu0 0.0
        %753 = vmatprep.subr.mxu0 0.0
        %754 = vmatpush2.msra.mxu0 0.0
        %755 = vmatprep.subr.mxu0 0.0
        %756 = vmatpush2.msra.mxu0 0.0
        %757 = vmatprep.subr.mxu0 0.0
        %758 = vmatpush2.msra.mxu0 0.0
        %759 = vmatprep.subr.mxu0 0.0
        %760 = vmatpush2.msra.mxu0 0.0
        %761 = vmatprep.subr.mxu0 0.0
        %762 = vmatpush2.msra.mxu0 0.0
        %763 = vmatprep.subr.mxu0 0.0
        %764 = vmatpush2.msra.mxu0 0.0
        %765 = vmatprep.subr.mxu0 0.0
        %766 = vmatpush2.msra.mxu0 0.0
        %767 = vmatprep.subr.mxu0 0.0
        %768 = vmatpush2.msra.mxu0 0.0
        %769 = vmatprep.subr.mxu0 0.0
        %770 = vmatpush2.msra.mxu0 0.0
        %771 = vmatprep.subr.mxu0 0.0
        %772 = vmatpush2.msra.mxu0 0.0
        %773 = vmatprep.subr.mxu0 0.0
        %774 = vmatpush2.msra.mxu0 0.0
        %775 = vmatprep.subr.mxu0 0.0
        %776 = vmatpush2.msra.mxu0 0.0
        %777 = vmatprep.subr.mxu0 0.0
        %778 = vmatpush2.msra.mxu0 0.0
        %779 = vmatprep.subr.mxu0 0.0
        %780 = vmatpush2.msra.mxu0 0.0
        %781 = vmatprep.mubr.f32.mxu0 0.0
        %782 = vmatmul.mubr.f32.gmra.mxu0 %v715
        %v783 = vpop.f32.mrf.mxu0
        %v784 = vadd.f32 0.0, %v783
        %v785 = vpop.f32.mrf.mxu0
        %v786 = vadd.f32 0.0, %v785
        %787 = vdwg.mxu0
        %788 = vst [vmem:[%s211] sm:$0xff] %v784
        %789 = vst [vmem:[%s211 + $0x8] sm:$0xff] %v786
        %s790 = sand.u32 %s97, 1
        %s791 = scalar_lea.sflag [#allocation6], %s790
        %s792 = sand.u32 %s97, 1
        %s793 = smul.addr %s792, 16
        %s794 = scalar_lea.vmem [#allocation10], %s793
        // Predicated region
        $region45: #{tpu_custom_call.1} parent=31 // pred_check
          %p795 = pneg %p107
        $region46: #{tpu_custom_call.1} parent=31 // pred_check_branch
          %797 = sbr.rel (%p795) target = $region48
        $region47: #{tpu_custom_call.1} parent=31 // pred_region
          %s799 = ssub.s32 256, 256
          %800 = vsyncadd %s791, %s799
          %s801 = smul.addr %s21, 2
          %s802 = smul.addr %s801, 128
          %s803 = scalar_lea.hbm %s3, %s802
          %s805 = sshll.u32 %s794, 4
          %s806 = int_to_ptr.vmem [resolvable:$true] %s805
          %808 = dma.vmem_to_hbm [thread:$0]  %s806, 256, %s803, %s791
        $region48: #{tpu_custom_call.1} parent=31 // pred_fallthru
          _
      $region32: #{tpu_custom_call.1} parent=5 // pred_fallthru
        _
      %p809 = scmp.le.s32.totalorder 2, %s16
      // Predicated region
      $region49: #{tpu_custom_call.1} parent=5 // pred_check
        %p810 = pneg %p809
      $region50: #{tpu_custom_call.1} parent=5 // pred_check_branch
        %812 = sbr.rel (%p810) target = $region52
      $region51: #{tpu_custom_call.1} parent=5 // pred_region
        %s813 = ssub.s32 %s16, 2
        // Predicated region
        $region53: #{tpu_custom_call.1} parent=51 // pred_check
          %p814 = pneg %p113
        $region54: #{tpu_custom_call.1} parent=51 // pred_check_branch
          %816 = sbr.rel (%p814) target = $region56
        $region55: #{tpu_custom_call.1} parent=51 // pred_region
          %s817 = sand.u32 %s98, 1
          %s818 = scalar_lea.sflag [#allocation6], %s817
          %s819 = sand.u32 %s98, 1
          %s820 = smul.addr %s819, 16
          %s821 = scalar_lea.vmem [#allocation10], %s820
          %822 = dma.done %s818, 256
        $region56: #{tpu_custom_call.1} parent=51 // pred_fallthru
          _
      $region52: #{tpu_custom_call.1} parent=5 // pred_fallthru
        _
    $region6: #{tpu_custom_call.1} parent=1 // loop_footer
      %s20 = sadd.s32 1, %s16
    $region7: #{tpu_custom_call.1} parent=1 // loop_footer_branch
      %15 = sbr.rel target = $region3
    $region8: #{tpu_custom_call.1} parent=1 // loop_exit
      _
    %823 = vsyncpa [#allocation5], 1
    %s824 = scalar_lea.sflag [#allocation5], 1
    %825 = vsyncpa %s824, 1
    %826 = vsyncpa [#allocation8], 1
    %827 = vsyncpa [#allocation6], 1
    %s828 = scalar_lea.sflag [#allocation6], 1
    %829 = vsyncpa %s828, 1

</llo_original>
